<compile_context>
chip_gen: v5e
topology: v5e:2x2
jax: 0.10.0
libtpu: 0.0.40
codegen_flags: <defaults>
</compile_context>

<pallas_src>
import jax
import jax.numpy as jnp
from jax.experimental import pallas as pl
from jax.experimental.pallas import tpu as pltpu


# ~1 MiB per block buffer: conservative across v5e (16 MiB scoped VMEM),
# v6e (32 MiB scoped) and v7x (64 MiB physical / 32 MiB scoped).
_TARGET_BLOCK_BYTES = 1 << 20


def _add_kernel(x_ref, r_ref, o_ref):
    # Pure VPU elementwise add on a lane-dense (rows_block, lane) tile.
    o_ref[...] = x_ref[...] + r_ref[...]


def daf_forward(x: jax.Array, residual: jax.Array) -> jax.Array:
    """Pallas implementation of DAF.forward(x, residual) = x + residual."""
    assert x.shape == residual.shape, "x and residual must have identical shapes"
    assert x.dtype == residual.dtype, "x and residual must have identical dtypes"

    numel = x.size
    dtype_bytes = jnp.dtype(x.dtype).itemsize

    # Pick the widest lane-dense width (multiple of 128) that divides the
    # element count; the flatten is a pure view of contiguous NCHW data.
    lane = None
    for cand in (512, 256, 128):
        if numel % cand == 0:
            lane = cand
            break
    if lane is None:
        # No lane-dense 2D flatten exists; a Pallas launch would be pure
        # overhead here, so let XLA fuse the residual add.
        return x + residual

    rows = numel // lane

    # Rows per block: target ~1 MiB per buffer, keep a multiple of 8 so the
    # (8, 128) tiling rule is satisfied; a single full-extent block is also
    # always legal when the whole slab is small.
    target_rows = max(8, (_TARGET_BLOCK_BYTES // (lane * dtype_bytes)) // 8 * 8)
    if rows <= target_rows:
        rows_block = rows          # full-extent block (legal even if rows % 8 != 0)
    else:
        rows_block = target_rows   # multiple of 8; last block may be ragged (masked)

    grid = (pl.cdiv(rows, rows_block),)

    x2 = x.reshape(rows, lane)
    r2 = residual.reshape(rows, lane)

    spec = pl.BlockSpec((rows_block, lane), lambda i: (i, 0))

    out2 = pl.pallas_call(
        _add_kernel,
        out_shape=jax.ShapeDtypeStruct((rows, lane), x.dtype),
        grid=grid,
        in_specs=[spec, spec],
        out_specs=spec,
        # Donate x's HBM buffer to the output (elementwise add is in-place safe).
        input_output_aliases={0: 0},
        compiler_params=pltpu.CompilerParams(
            dimension_semantics=("parallel",),
        ),
        cost_estimate=pl.CostEstimate(
            flops=numel,
            transcendentals=0,
            bytes_accessed=3 * numel * dtype_bytes,
        ),
    )(x2, r2)

    return out2.reshape(x.shape)


if __name__ == "__main__":
    key = jax.random.PRNGKey(0)
    kx, kr = jax.random.split(key)

    # Small NCHW shapes consistent with the fusion module.
    x = jax.random.normal(kx, (2, 4, 16, 16), dtype=jnp.float32)
    residual = jax.random.normal(kr, (2, 4, 16, 16), dtype=jnp.float32)

    # Reference computed before the kernel call (x's buffer is donated to the output).
    ref = x + residual

    out = daf_forward(x, residual)
    out = jax.block_until_ready(out)

    assert out.shape == ref.shape and out.dtype == ref.dtype
    assert jnp.allclose(out, ref, atol=1e-6), "mismatch vs reference (small shape)"

    # Secondary check exercising the multi-block (grid > 1) path.
    kx2, kr2 = jax.random.split(jax.random.PRNGKey(1))
    xb = jax.random.normal(kx2, (4, 16, 128, 128), dtype=jnp.float32)
    rb = jax.random.normal(kr2, (4, 16, 128, 128), dtype=jnp.float32)
    refb = xb + rb
    outb = jax.block_until_ready(daf_forward(xb, rb))
    assert jnp.allclose(outb, refb, atol=1e-6), "mismatch vs reference (multi-block)"

    print("KERNEL_OK")
</pallas_src>

<mosaic_0001>
module attributes {stable_mosaic.version = 11 : i64} {
  func.func @_add_kernel(%arg0: i32, %arg1: memref<4x512xf32, #tpu.memory_space<vmem>>, %arg2: memref<4x512xf32, #tpu.memory_space<vmem>>, %arg3: memref<4x512xf32, #tpu.memory_space<vmem>>) attributes {dimension_semantics = [#tpu.dimension_semantics<parallel>], iteration_bounds = array<i64: 1>, scalar_prefetch = 0 : i64, scratch_operands = 0 : i64, tpu.core_type = #tpu.core_type<tc>, window_params = [{transform_indices = @transform_0, window_bounds = array<i64: 4, 512>}, {transform_indices = @transform_1, window_bounds = array<i64: 4, 512>}, {transform_indices = @transform_2, window_bounds = array<i64: 4, 512>}]} {
    %c0 = arith.constant 0 : index
    %c0_0 = arith.constant 0 : index
    %0 = vector.load %arg1[%c0, %c0_0] : memref<4x512xf32, #tpu.memory_space<vmem>>, vector<4x512xf32>
    %c0_1 = arith.constant 0 : index
    %c0_2 = arith.constant 0 : index
    %1 = vector.load %arg2[%c0_1, %c0_2] : memref<4x512xf32, #tpu.memory_space<vmem>>, vector<4x512xf32>
    %2 = arith.addf %0, %1 : vector<4x512xf32>
    %c0_3 = arith.constant 0 : index
    %c0_4 = arith.constant 0 : index
    %3 = vector.load %arg3[%c0_3, %c0_4] : memref<4x512xf32, #tpu.memory_space<vmem>>, vector<4x512xf32>
    tpu.vector_store %arg3[%c0_3, %c0_4], %2 {strides = array<i32>} : memref<4x512xf32, #tpu.memory_space<vmem>>, vector<4x512xf32>,
    return
  }
  func.func @transform_0(%arg0: i32) -> (i32, i32) {
    %c0_i32 = arith.constant 0 : i32
    %c0_i32_0 = arith.constant 0 : i32
    return %arg0, %c0_i32 : i32, i32
  }
  func.func @transform_1(%arg0: i32) -> (i32, i32) {
    %c0_i32 = arith.constant 0 : i32
    %c0_i32_0 = arith.constant 0 : i32
    return %arg0, %c0_i32 : i32, i32
  }
  func.func @transform_2(%arg0: i32) -> (i32, i32) {
    %c0_i32 = arith.constant 0 : i32
    %c0_i32_0 = arith.constant 0 : i32
    return %arg0, %c0_i32 : i32, i32
  }
}

</mosaic_0001>

<llo_original>
// kernel: tpu_custom_call.1
$region0: #{tpu_custom_call.1}
  #allocation0 [shape = 'u32[]', space=smem, size = 0x4, offset = 0x4, fixed_abs, tag = 'smem constant byte address 0x4 - core index']
  #allocation1 [shape = 'u32[72,128]{1,0:T(1,128)}', space=vmem, size = 0x9000, scoped, tag = 'internal scratch']
  %s0 = inlined_call_operand.hbm [shape: f32[4,512], index: 0, kind: input, shape index: {}, may-alias: {0,2}]
  %s1 = inlined_call_operand.vmem [shape: f32[4,512], index: 1, kind: input, shape index: {}]
  %s2 = inlined_call_operand.hbm [shape: f32[4,512], index: 2, kind: output, shape index: {}, may-alias: {0,2}]
  %s3 = sld [smem:[#allocation0]]
  $region22: #{tpu_custom_call.1} parent=0
    _
  %s5 = ssub.s32 1, %s3
  %s6 = scalar_select 0, %s5, %s3
  $region1: #{tpu_custom_call.1} parent=0
    #allocation2 [shape = 'u8[8192]{0}', space=vmem, size = 0x2000, scoped, tag = 'input window, operand 0, single buffered']
    #allocation3 [shape = 's32[1]{0}', space=sflag, size = 0x4, scoped, tag = 'scoped memory for tpu_custom_call.1']
    #allocation4 [shape = 's32[1]{0}', space=sflag, size = 0x4, scoped, tag = 'scoped memory for tpu_custom_call.1']
    #allocation5 [shape = 'u8[8192]{0}', space=vmem, size = 0x2000, scoped, tag = 'output window, operand 0, single buffered']
    %7 = vsyncpa [#allocation3], 0
    %8 = vsyncpa [#allocation4], 0
    // Predicated region
    $region2: #{tpu_custom_call.1} parent=1 // pred_check
      _
    $region3: #{tpu_custom_call.1} parent=1 // pred_check_branch
      %10 = sbr.rel (0) target = $region5
    $region4: #{tpu_custom_call.1} parent=1 // pred_region
      %12 = vsyncadd [#allocation3], 0
      %s14 = sshll.u32 %s0, 4
      %s15 = int_to_ptr.hbm [resolvable:$true] %s14
      %s16 = sshll.u32 [#allocation2], 4
      %s17 = int_to_ptr.vmem [resolvable:$true] %s16
      %19 = dma.hbm_to_vmem [thread:$0]  %s15, 256, %s17, [#allocation3]
    $region5: #{tpu_custom_call.1} parent=1 // pred_fallthru
      _
    // Predicated region
    $region6: #{tpu_custom_call.1} parent=1 // pred_check
      _
    $region7: #{tpu_custom_call.1} parent=1 // pred_check_branch
      %21 = sbr.rel (0) target = $region9
    $region8: #{tpu_custom_call.1} parent=1 // pred_region
      _
    $region9: #{tpu_custom_call.1} parent=1 // pred_fallthru
      _
    // Predicated region
    $region10: #{tpu_custom_call.1} parent=1 // pred_check
      _
    $region11: #{tpu_custom_call.1} parent=1 // pred_check_branch
      %23 = sbr.rel (0) target = $region13
    $region12: #{tpu_custom_call.1} parent=1 // pred_region
      %25 = dma.done [#allocation3], 256
    $region13: #{tpu_custom_call.1} parent=1 // pred_fallthru
      _
    %v26 = vld [vmem:[#allocation2] sm:$0xff]
    %v27 = vld [vmem:[#allocation2 + $0x8] sm:$0xff]
    %v28 = vld [vmem:[%s1] sm:$0xff]
    %v29 = vld [vmem:[%s1 + $0x8] sm:$0xff]
    %v30 = vadd.f32 %v26, %v28
    %v31 = vadd.f32 %v27, %v29
    %32 = vst [vmem:[#allocation5] sm:$0xff] %v30
    %33 = vst [vmem:[#allocation5 + $0x8] sm:$0xff] %v31
    // Predicated region
    $region14: #{tpu_custom_call.1} parent=1 // pred_check
      _
    $region15: #{tpu_custom_call.1} parent=1 // pred_check_branch
      %35 = sbr.rel (0) target = $region17
    $region16: #{tpu_custom_call.1} parent=1 // pred_region
      %37 = vsyncadd [#allocation4], 0
      %s39 = sshll.u32 [#allocation5], 4
      %s40 = int_to_ptr.vmem [resolvable:$true] %s39
      %s41 = sshll.u32 %s2, 4
      %s42 = int_to_ptr.hbm [resolvable:$true] %s41
      %44 = dma.vmem_to_hbm [thread:$0]  %s40, 256, %s42, [#allocation4]
    $region17: #{tpu_custom_call.1} parent=1 // pred_fallthru
      _
    // Predicated region
    $region18: #{tpu_custom_call.1} parent=1 // pred_check
      _
    $region19: #{tpu_custom_call.1} parent=1 // pred_check_branch
      %46 = sbr.rel (0) target = $region21
    $region20: #{tpu_custom_call.1} parent=1 // pred_region
      %48 = dma.done [#allocation4], 256
    $region21: #{tpu_custom_call.1} parent=1 // pred_fallthru
      _
    %49 = vsyncpa [#allocation3], 1
    %50 = vsyncpa [#allocation4], 1

</llo_original>
